<compile_context>
chip_gen: v7x
topology: tpu7x:2x2x1
jax: 0.10.0
libtpu: 0.0.40
codegen_flags: <defaults>
</compile_context>

<pallas_src>
import jax
import jax.numpy as jnp
import numpy as np
from jax.experimental import pallas as pl
from jax.experimental.pallas import tpu as pltpu


def _round_up(x, m):
    return (x + m - 1) // m * m


# ------------------------------- kernel -------------------------------------

def ffn_kernel(x_ref, w1_ref, b1_ref, w2_ref, b2_ref, o_ref, acc_ref):
    """One (TM, E) row tile x one TH-wide chunk of the hidden dim.

    grid = (row_tiles, hidden_chunks).  The hidden axis is the reduction axis
    of the second matmul, so the f32 accumulator persists across it.
    """
    k = pl.program_id(1)

    @pl.when(k == 0)
    def _():
        acc_ref[...] = jnp.zeros_like(acc_ref)

    # x / w1 already bf16 -> straight to the MXU; accumulate in f32.
    # Bias add + ReLU in f32 (exact, v5e-safe); ReLU distributes over H chunks.
    h = jnp.dot(x_ref[...], w1_ref[...],
                preferred_element_type=jnp.float32) + b1_ref[...]
    h = jnp.maximum(h, 0.0)
    acc_ref[...] += jnp.dot(h.astype(jnp.bfloat16), w2_ref[...],
                            preferred_element_type=jnp.float32)

    @pl.when(k == pl.num_programs(1) - 1)
    def _():
        # Lane-dense (E_out is a 128 multiple) store in the caller's dtype.
        o_ref[...] = (acc_ref[...] + b2_ref[...]).astype(o_ref.dtype)


# --------------------------- parameter prep ----------------------------------

_RESIDENT_WEIGHT_BYTES = 8 << 20   # bf16 w1+w2 below this stay fully resident
_STREAM_TH = 512                   # hidden-dim chunk width when streaming


def prepare_ffn_params(w1, b1, w2, b2):
    """One-time weight cast/pad, hoisted out of the per-call forward path."""
    E, H = w1.shape
    E_out = _round_up(E, 128)
    resident = (E * H + H * E_out) * 2 <= _RESIDENT_WEIGHT_BYTES
    TH = H if resident else _STREAM_TH
    H_pad = _round_up(H, TH)
    # Zero-padding H is exact: ReLU(0 + 0) = 0 and padded w2 rows are 0.
    w1p = jnp.pad(w1, ((0, 0), (0, H_pad - H))).astype(jnp.bfloat16)
    b1p = jnp.pad(b1.reshape(1, -1), ((0, 0), (0, H_pad - H))).astype(jnp.float32)
    w2p = jnp.pad(w2, ((0, H_pad - H), (0, E_out - E))).astype(jnp.bfloat16)
    b2p = jnp.pad(b2.reshape(1, -1), ((0, 0), (0, E_out - E))).astype(jnp.float32)
    return dict(w1=w1p, b1=b1p, w2=w2p, b2=b2p, E=E, TH=TH)


# ------------------------------- wrapper ------------------------------------

def feed_forward(x, params):
    """y = ReLU(x @ w1 + b1) @ w2 + b2 over the last axis of x (eval mode)."""
    w1p, b1p, w2p, b2p = params["w1"], params["b1"], params["w2"], params["b2"]
    E, TH = params["E"], params["TH"]
    H_pad = w1p.shape[1]
    E_out = w2p.shape[1]
    out_dtype = x.dtype
    orig_shape = x.shape

    # x is the only per-step streamed operand: one lane/sublane-dense bf16 slab.
    x2 = x.reshape(-1, E).astype(jnp.bfloat16)
    M = x2.shape[0]

    # Row tile: multiple of 8 sublanes, large enough to amortize per-step
    # overhead, and (when M allows) >= 2 row tiles so a dual-TensorCore chip
    # can shard the "parallel" axis.
    M8 = _round_up(M, 8)
    TM = min(256, M8)
    if M8 > 8 and M8 // TM < 2:
        TM = _round_up(M8 // 2, 8)
    M_pad = _round_up(M, TM)
    if M_pad != M:
        x2 = jnp.pad(x2, ((0, M_pad - M), (0, 0)))

    grid = (M_pad // TM, H_pad // TH)

    # VMEM footprint estimate (double-buffered operands + acc + h temp);
    # only raise the scoped limit when the conservative default may not fit.
    out_itemsize = jnp.dtype(out_dtype).itemsize
    vmem_est = (2 * TM * E * 2                     # x tile (bf16)
                + 2 * (E * TH + TH * E_out) * 2    # w1 / w2 chunks (bf16)
                + 2 * (TH + E_out) * 4             # biases (f32)
                + 2 * TM * E_out * out_itemsize    # output tile
                + TM * E_out * 4                   # accumulator scratch
                + TM * TH * 4)                     # h intermediate
    vmem_limit = None
    if vmem_est > (12 << 20):
        vmem_limit = min(int(vmem_est) * 2 + (8 << 20), 64 << 20)

    flops = 2 * M_pad * E * H_pad + 2 * M_pad * H_pad * E_out
    bytes_accessed = (x2.size * 2
                      + grid[0] * (w1p.size + w2p.size) * 2
                      + (b1p.size + b2p.size) * 4
                      + M_pad * E_out * out_itemsize)

    out = pl.pallas_call(
        ffn_kernel,
        out_shape=jax.ShapeDtypeStruct((M_pad, E_out), out_dtype),
        grid=grid,
        in_specs=[
            pl.BlockSpec((TM, E), lambda i, k: (i, 0)),      # x tile (const over k)
            pl.BlockSpec((E, TH), lambda i, k: (0, k)),      # w1 chunk
            pl.BlockSpec((1, TH), lambda i, k: (0, k)),      # b1 chunk
            pl.BlockSpec((TH, E_out), lambda i, k: (k, 0)),  # w2 chunk
            pl.BlockSpec((1, E_out), lambda i, k: (0, 0)),   # b2
        ],
        out_specs=pl.BlockSpec((TM, E_out), lambda i, k: (i, 0)),
        scratch_shapes=[pltpu.VMEM((TM, E_out), jnp.float32)],
        compiler_params=pltpu.CompilerParams(
            dimension_semantics=("parallel", "arbitrary"),
            vmem_limit_bytes=vmem_limit),
        cost_estimate=pl.CostEstimate(
            flops=flops, transcendentals=0, bytes_accessed=bytes_accessed),
    )(x2, w1p, b1p, w2p, b2p)

    # TODO(synk): nn.Dropout(0.2) omitted (eval-mode identity); training mode
    # would need pltpu.prng_seed + pltpu.prng_random_bits masking by 1/(1-p).
    return out[:M, :E].reshape(orig_shape)


# --------------------------------- main --------------------------------------

if __name__ == "__main__":
    B, T, n_embed = 2, 8, 32
    key = jax.random.PRNGKey(0)
    kx, k1, kb1, k2, kb2 = jax.random.split(key, 5)

    x = jax.random.normal(kx, (B, T, n_embed), jnp.float32)
    w1 = 0.02 * jax.random.normal(k1, (n_embed, 4 * n_embed), jnp.float32)
    b1 = 0.02 * jax.random.normal(kb1, (4 * n_embed,), jnp.float32)
    w2 = 0.02 * jax.random.normal(k2, (4 * n_embed, n_embed), jnp.float32)
    b2 = 0.02 * jax.random.normal(kb2, (n_embed,), jnp.float32)

    params = prepare_ffn_params(w1, b1, w2, b2)   # one-time weight prep
    y = jax.block_until_ready(feed_forward(x, params))

    # Reference is f32; kernel uses bf16 MXU operands (incl. a bf16-cast x)
    # with f32 accumulation -> intentional quantization, relaxed tolerance.
    ref = jnp.maximum(x @ w1 + b1, 0.0) @ w2 + b2
    np.testing.assert_allclose(np.asarray(y), np.asarray(ref),
                               atol=2e-2, rtol=2e-2)
    assert y.shape == (B, T, n_embed) and y.dtype == x.dtype
    print("KERNEL_OK")
</pallas_src>

<mosaic_0001>
module attributes {stable_mosaic.version = 11 : i64} {
  func.func @ffn_kernel(%arg0: i32, %arg1: i32, %arg2: memref<8x32xbf16, #tpu.memory_space<vmem>>, %arg3: memref<32x128xbf16, #tpu.memory_space<vmem>>, %arg4: memref<1x128xf32, #tpu.memory_space<vmem>>, %arg5: memref<128x128xbf16, #tpu.memory_space<vmem>>, %arg6: memref<1x128xf32, #tpu.memory_space<vmem>>, %arg7: memref<8x128xf32, #tpu.memory_space<vmem>>, %arg8: memref<8x128xf32, #tpu.memory_space<vmem>>) attributes {dimension_semantics = [#tpu.dimension_semantics<parallel>, #tpu.dimension_semantics<arbitrary>], iteration_bounds = array<i64: 2, 1>, scalar_prefetch = 0 : i64, scratch_operands = 1 : i64, tpu.core_type = #tpu.core_type<tc>, window_params = [{transform_indices = @transform_0, window_bounds = array<i64: 8, 32>}, {transform_indices = @transform_1, window_bounds = array<i64: 32, 128>}, {transform_indices = @transform_2, window_bounds = array<i64: 1, 128>}, {transform_indices = @transform_3, window_bounds = array<i64: 128, 128>}, {pipeline_mode = #tpu.pipeline_mode<synchronous>, transform_indices = @transform_4, window_bounds = array<i64: 1, 128>}, {transform_indices = @transform_5, window_bounds = array<i64: 8, 128>}]} {
    %c0_i32 = arith.constant 0 : i32
    %0 = arith.cmpi eq, %arg1, %c0_i32 : i32
    %1 = arith.extui %0 : i1 to i32
    %c0_i32_0 = arith.constant 0 : i32
    %2 = arith.cmpi ne, %1, %c0_i32_0 : i32
    scf.if %2 {
      %cst_16 = arith.constant 0.000000e+00 : f32
      %20 = vector.broadcast %cst_16 : f32 to vector<8x128xf32>
      %c0_17 = arith.constant 0 : index
      %c0_18 = arith.constant 0 : index
      %21 = vector.load %arg8[%c0_17, %c0_18] : memref<8x128xf32, #tpu.memory_space<vmem>>, vector<8x128xf32>
      tpu.vector_store %arg8[%c0_17, %c0_18], %20 {strides = array<i32>} : memref<8x128xf32, #tpu.memory_space<vmem>>, vector<8x128xf32>,
    } else {
    }
    %c0 = arith.constant 0 : index
    %c0_1 = arith.constant 0 : index
    %3 = vector.load %arg2[%c0, %c0_1] : memref<8x32xbf16, #tpu.memory_space<vmem>>, vector<8x32xbf16>
    %c0_2 = arith.constant 0 : index
    %c0_3 = arith.constant 0 : index
    %4 = vector.load %arg3[%c0_2, %c0_3] : memref<32x128xbf16, #tpu.memory_space<vmem>>, vector<32x128xbf16>
    %cst = arith.constant dense<0.000000e+00> : vector<8x128xf32>
    %5 = tpu.matmul %3, %4, %cst {dimension_numbers = #tpu.dot_dimension_numbers<[1], [0], [0], [1], [0, 0, 1, 1], [], []>} : vector<8x32xbf16>, vector<32x128xbf16>, vector<8x128xf32> -> vector<8x128xf32>
    %c0_4 = arith.constant 0 : index
    %c0_5 = arith.constant 0 : index
    %6 = vector.load %arg4[%c0_4, %c0_5] : memref<1x128xf32, #tpu.memory_space<vmem>>, vector<1x128xf32>
    %7 = vector.broadcast %6 : vector<1x128xf32> to vector<8x128xf32>
    %8 = arith.addf %5, %7 : vector<8x128xf32>
    %cst_6 = arith.constant 0.000000e+00 : f32
    %9 = vector.broadcast %cst_6 : f32 to vector<8x128xf32>
    %10 = arith.maximumf %8, %9 : vector<8x128xf32>
    %c0_7 = arith.constant 0 : index
    %c0_8 = arith.constant 0 : index
    %11 = vector.load %arg8[%c0_7, %c0_8] : memref<8x128xf32, #tpu.memory_space<vmem>>, vector<8x128xf32>
    %12 = arith.truncf %10 : vector<8x128xf32> to vector<8x128xbf16>
    %c0_9 = arith.constant 0 : index
    %c0_10 = arith.constant 0 : index
    %13 = vector.load %arg5[%c0_9, %c0_10] : memref<128x128xbf16, #tpu.memory_space<vmem>>, vector<128x128xbf16>
    %cst_11 = arith.constant dense<0.000000e+00> : vector<8x128xf32>
    %14 = tpu.matmul %12, %13, %cst_11 {dimension_numbers = #tpu.dot_dimension_numbers<[1], [0], [0], [1], [0, 0, 1, 1], [], []>} : vector<8x128xbf16>, vector<128x128xbf16>, vector<8x128xf32> -> vector<8x128xf32>
    %15 = arith.addf %11, %14 : vector<8x128xf32>
    %c0_12 = arith.constant 0 : index
    %c0_13 = arith.constant 0 : index
    %16 = vector.load %arg8[%c0_12, %c0_13] : memref<8x128xf32, #tpu.memory_space<vmem>>, vector<8x128xf32>
    tpu.vector_store %arg8[%c0_12, %c0_13], %15 {strides = array<i32>} : memref<8x128xf32, #tpu.memory_space<vmem>>, vector<8x128xf32>,
    %c0_i32_14 = arith.constant 0 : i32
    %17 = arith.cmpi eq, %arg1, %c0_i32_14 : i32
    %18 = arith.extui %17 : i1 to i32
    %c0_i32_15 = arith.constant 0 : i32
    %19 = arith.cmpi ne, %18, %c0_i32_15 : i32
    scf.if %19 {
      %c0_16 = arith.constant 0 : index
      %c0_17 = arith.constant 0 : index
      %20 = vector.load %arg8[%c0_16, %c0_17] : memref<8x128xf32, #tpu.memory_space<vmem>>, vector<8x128xf32>
      %c0_18 = arith.constant 0 : index
      %c0_19 = arith.constant 0 : index
      %21 = vector.load %arg6[%c0_18, %c0_19] : memref<1x128xf32, #tpu.memory_space<vmem>>, vector<1x128xf32>
      %22 = vector.broadcast %21 : vector<1x128xf32> to vector<8x128xf32>
      %23 = arith.addf %20, %22 : vector<8x128xf32>
      %c0_20 = arith.constant 0 : index
      %c0_21 = arith.constant 0 : index
      %24 = vector.load %arg7[%c0_20, %c0_21] : memref<8x128xf32, #tpu.memory_space<vmem>>, vector<8x128xf32>
      tpu.vector_store %arg7[%c0_20, %c0_21], %23 {strides = array<i32>} : memref<8x128xf32, #tpu.memory_space<vmem>>, vector<8x128xf32>,
    } else {
    }
    return
  }
  func.func @transform_0(%arg0: i32, %arg1: i32) -> (i32, i32) {
    %c0_i32 = arith.constant 0 : i32
    %c0_i32_0 = arith.constant 0 : i32
    return %arg0, %c0_i32 : i32, i32
  }
  func.func @transform_1(%arg0: i32, %arg1: i32) -> (i32, i32) {
    %c0_i32 = arith.constant 0 : i32
    %c0_i32_0 = arith.constant 0 : i32
    return %c0_i32, %arg1 : i32, i32
  }
  func.func @transform_2(%arg0: i32, %arg1: i32) -> (i32, i32) {
    %c0_i32 = arith.constant 0 : i32
    %c0_i32_0 = arith.constant 0 : i32
    return %c0_i32, %arg1 : i32, i32
  }
  func.func @transform_3(%arg0: i32, %arg1: i32) -> (i32, i32) {
    %c0_i32 = arith.constant 0 : i32
    %c0_i32_0 = arith.constant 0 : i32
    return %arg1, %c0_i32 : i32, i32
  }
  func.func @transform_4(%arg0: i32, %arg1: i32) -> (i32, i32) {
    %c0_i32 = arith.constant 0 : i32
    %c0_i32_0 = arith.constant 0 : i32
    %c0_i32_1 = arith.constant 0 : i32
    return %c0_i32, %c0_i32_0 : i32, i32
  }
  func.func @transform_5(%arg0: i32, %arg1: i32) -> (i32, i32) {
    %c0_i32 = arith.constant 0 : i32
    %c0_i32_0 = arith.constant 0 : i32
    return %arg0, %c0_i32 : i32, i32
  }
}

</mosaic_0001>

<llo_original>
// kernel: tpu_custom_call.1
$region0: #{tpu_custom_call.1}
  #allocation0 [shape = 'u32[]', space=smem, size = 0x4, offset = 0x4, fixed_abs, tag = 'smem constant byte address 0x4 - core index']
  #allocation1 [shape = 'u32[144,128]{1,0:T(1,128)}', space=vmem, size = 0x12000, scoped, tag = 'internal scratch']
  #allocation2 [shape = 'f32[8,128]{1,0:T(8,128)}', space=vmem, size = 0x1000, scoped, tag = 'scratch operand']
  %s0 = inlined_call_operand.hbm [shape: bf16[16,32], index: 0, kind: input, shape index: {}]
  %s1 = inlined_call_operand.hbm [shape: bf16[32,128], index: 1, kind: input, shape index: {}]
  %s2 = inlined_call_operand.vmem [shape: f32[1,128], index: 2, kind: input, shape index: {}]
  %s3 = inlined_call_operand.hbm [shape: bf16[128,128], index: 3, kind: input, shape index: {}]
  %s4 = inlined_call_operand.vmem [shape: f32[1,128], index: 4, kind: input, shape index: {}]
  %s5 = inlined_call_operand.hbm [shape: f32[16,128], index: 5, kind: output, shape index: {}]
  %s6 = sld [smem:[#allocation0]]
  $region73: #{tpu_custom_call.1} parent=0
    _
  %s8 = ssub.s32 1, %s6
  %s9 = scalar_select 0, %s8, %s6
  $region1: #{tpu_custom_call.1} parent=0
    #allocation3 [shape = 'u8[4096]{0}', space=vmem, size = 0x1000, scoped, tag = 'input window, operand 0']
    #allocation4 [shape = 's32[2]{0}', space=sflag, size = 0x8, scoped, tag = 'scoped memory for tpu_custom_call.1']
    #allocation5 [shape = 's32[2]{0}', space=sflag, size = 0x8, scoped, tag = 'scoped memory for tpu_custom_call.1']
    #allocation6 [shape = 'u8[8192]{0}', space=vmem, size = 0x2000, scoped, tag = 'input window, operand 1, single buffered']
    #allocation7 [shape = 's32[1]{0}', space=sflag, size = 0x4, scoped, tag = 'scoped memory for tpu_custom_call.1']
    #allocation8 [shape = 'u8[32768]{0}', space=vmem, size = 0x8000, scoped, tag = 'input window, operand 3, single buffered']
    #allocation9 [shape = 'u8[8192]{0}', space=vmem, size = 0x2000, scoped, tag = 'output window, operand 0']
    %10 = vsyncpa [#allocation4], 0
    %s11 = scalar_lea.sflag [#allocation4], 1
    %12 = vsyncpa %s11, 0
    %13 = vsyncpa [#allocation7], 0
    %14 = vsyncpa [#allocation5], 0
    %s15 = scalar_lea.sflag [#allocation5], 1
    %16 = vsyncpa %s15, 0
    loop: start=0, step=1, limit=4
    $region2: #{tpu_custom_call.1} parent=1 // loop_pre_header
      _
    $region3: #{tpu_custom_call.1} parent=1 // loop_header
      %s18 = sphi 0, %s22
      %p19 = scmp.ge.s32.totalorder %s18, 4
      %s25 = sphi 0, %s37
      %s26 = sphi 0, %s33
      %s27 = sphi 0, %s25
      %s28 = sphi 0, %s26
      %s29 = sphi 0, %s27
      %s30 = sphi 0, %s28
      %s40 = sphi 0, %s42
      %s43 = sphi 0, %s40
      %s44 = sphi 0, %s43
      %s60 = sphi 0, %s44
      %s66 = sphi 0, %s68
      %s69 = sphi 0, %s66
      %s70 = sphi 0, %s69
      %s86 = sphi 0, %s70
      %s92 = sphi 0, %s94
      %s95 = sphi 0, %s92
      %s96 = sphi 0, %s95
      %s112 = sphi 0, %s96
      %s118 = sphi 0, %s120
      %s121 = sphi 0, %s118
      %s122 = sphi 0, %s121
      %s138 = sphi 0, %s122
      %s142 = sphi 0, %s142
      %s144 = sphi 0, %s142
      %s145 = sphi 0, %s144
      %s159 = sphi 0, %s145
      %s165 = sphi 0, %s167
      %s168 = sphi 0, %s165
      %s169 = sphi 0, %s168
      %s185 = sphi 0, %s169
    $region4: #{tpu_custom_call.1} parent=1 // loop_header_branch
      %21 = sbr.rel (%p19) target = $region8
    $region5: #{tpu_custom_call.1} parent=1 // loop_body
      %s23 = ssub.s32 %s18, 1
      %s24 = ssub.s32 %s18, 2
      %s31 = sadd.s32 1, %s26
      %p32 = scmp.ge.s32.totalorder %s31, 1
      %s33 = scalar_select %p32, 0, %s31
      %s34 = sadd.s32 1, %s25
      %s35 = scalar_select %p32, %s34, %s25
      %p36 = scmp.ge.s32.totalorder %s35, 2
      %s37 = scalar_select %p36, 0, %s35
      %s38 = ssub.s32 %s25, %s37
      %p39 = scmp.eq.s32.totalorder %s38, 0
      %s41 = sadd.s32 %s40, 1
      %s42 = scalar_select %p39, %s40, %s41
      %p45 = pneg %p39
      %p46 = scmp.eq.s32.totalorder %s18, 1
      %p47 = por %p45, %p46
      %p48 = scmp.ne.s32.totalorder %s40, %s43
      %p49 = scmp.eq.s32.totalorder %s18, 0
      %p50 = por %p48, %p49
      %p51 = scmp.ne.s32.totalorder %s40, %s43
      %p52 = scmp.eq.s32.totalorder %s23, 1
      %p53 = por %p51, %p52
      %p54 = scmp.ne.s32.totalorder %s43, %s44
      %p55 = scmp.eq.s32.totalorder %s23, 0
      %p56 = por %p54, %p55
      %p57 = scmp.ne.s32.totalorder %s43, %s44
      %p58 = scmp.eq.s32.totalorder %s24, 1
      %p59 = por %p57, %p58
      %p61 = scmp.ne.s32.totalorder %s44, %s60
      %p62 = scmp.eq.s32.totalorder %s24, 0
      %p63 = por %p61, %p62
      %s64 = ssub.s32 %s26, %s33
      %p65 = scmp.eq.s32.totalorder %s64, 0
      %s67 = sadd.s32 %s66, 1
      %s68 = scalar_select %p65, %s66, %s67
      %p71 = pneg %p65
      %p72 = scmp.eq.s32.totalorder %s18, 1
      %p73 = por %p71, %p72
      %p74 = scmp.ne.s32.totalorder %s66, %s69
      %p75 = scmp.eq.s32.totalorder %s18, 0
      %p76 = por %p74, %p75
      %p77 = scmp.ne.s32.totalorder %s66, %s69
      %p78 = scmp.eq.s32.totalorder %s23, 1
      %p79 = por %p77, %p78
      %p80 = scmp.ne.s32.totalorder %s69, %s70
      %p81 = scmp.eq.s32.totalorder %s23, 0
      %p82 = por %p80, %p81
      %p83 = scmp.ne.s32.totalorder %s69, %s70
      %p84 = scmp.eq.s32.totalorder %s24, 1
      %p85 = por %p83, %p84
      %p87 = scmp.ne.s32.totalorder %s70, %s86
      %p88 = scmp.eq.s32.totalorder %s24, 0
      %p89 = por %p87, %p88
      %s90 = ssub.s32 %s26, %s33
      %p91 = scmp.eq.s32.totalorder %s90, 0
      %s93 = sadd.s32 %s92, 1
      %s94 = scalar_select %p91, %s92, %s93
      %p97 = pneg %p91
      %p98 = scmp.eq.s32.totalorder %s18, 1
      %p99 = por %p97, %p98
      %p100 = scmp.ne.s32.totalorder %s92, %s95
      %p101 = scmp.eq.s32.totalorder %s18, 0
      %p102 = por %p100, %p101
      %p103 = scmp.ne.s32.totalorder %s92, %s95
      %p104 = scmp.eq.s32.totalorder %s23, 1
      %p105 = por %p103, %p104
      %p106 = scmp.ne.s32.totalorder %s95, %s96
      %p107 = scmp.eq.s32.totalorder %s23, 0
      %p108 = por %p106, %p107
      %p109 = scmp.ne.s32.totalorder %s95, %s96
      %p110 = scmp.eq.s32.totalorder %s24, 1
      %p111 = por %p109, %p110
      %p113 = scmp.ne.s32.totalorder %s96, %s112
      %p114 = scmp.eq.s32.totalorder %s24, 0
      %p115 = por %p113, %p114
      %s116 = ssub.s32 %s26, %s33
      %p117 = scmp.eq.s32.totalorder %s116, 0
      %s119 = sadd.s32 %s118, 1
      %s120 = scalar_select %p117, %s118, %s119
      %p123 = pneg %p117
      %p124 = scmp.eq.s32.totalorder %s18, 1
      %p125 = por %p123, %p124
      %p126 = scmp.ne.s32.totalorder %s118, %s121
      %p127 = scmp.eq.s32.totalorder %s18, 0
      %p128 = por %p126, %p127
      %p129 = scmp.ne.s32.totalorder %s118, %s121
      %p130 = scmp.eq.s32.totalorder %s23, 1
      %p131 = por %p129, %p130
      %p132 = scmp.ne.s32.totalorder %s121, %s122
      %p133 = scmp.eq.s32.totalorder %s23, 0
      %p134 = por %p132, %p133
      %p135 = scmp.ne.s32.totalorder %s121, %s122
      %p136 = scmp.eq.s32.totalorder %s24, 1
      %p137 = por %p135, %p136
      %p139 = scmp.ne.s32.totalorder %s122, %s138
      %p140 = scmp.eq.s32.totalorder %s24, 0
      %p141 = por %p139, %p140
      %s143 = sadd.s32 %s142, 1
      %p146 = scmp.eq.s32.totalorder %s18, 1
      %p147 = scmp.ne.s32.totalorder %s142, %s144
      %p148 = scmp.eq.s32.totalorder %s18, 0
      %p149 = por %p147, %p148
      %p150 = scmp.ne.s32.totalorder %s142, %s144
      %p151 = scmp.eq.s32.totalorder %s23, 1
      %p152 = por %p150, %p151
      %p153 = scmp.ne.s32.totalorder %s144, %s145
      %p154 = scmp.eq.s32.totalorder %s23, 0
      %p155 = por %p153, %p154
      %p156 = scmp.ne.s32.totalorder %s144, %s145
      %p157 = scmp.eq.s32.totalorder %s24, 1
      %p158 = por %p156, %p157
      %p160 = scmp.ne.s32.totalorder %s145, %s159
      %p161 = scmp.eq.s32.totalorder %s24, 0
      %p162 = por %p160, %p161
      %s163 = ssub.s32 %s25, %s37
      %p164 = scmp.eq.s32.totalorder %s163, 0
      %s166 = sadd.s32 %s165, 1
      %s167 = scalar_select %p164, %s165, %s166
      %p170 = pneg %p164
      %p171 = scmp.eq.s32.totalorder %s18, 1
      %p172 = por %p170, %p171
      %p173 = scmp.ne.s32.totalorder %s165, %s168
      %p174 = scmp.eq.s32.totalorder %s18, 0
      %p175 = por %p173, %p174
      %p176 = scmp.ne.s32.totalorder %s165, %s168
      %p177 = scmp.eq.s32.totalorder %s23, 1
      %p178 = por %p176, %p177
      %p179 = scmp.ne.s32.totalorder %s168, %s169
      %p180 = scmp.eq.s32.totalorder %s23, 0
      %p181 = por %p179, %p180
      %p182 = scmp.ne.s32.totalorder %s168, %s169
      %p183 = scmp.eq.s32.totalorder %s24, 1
      %p184 = por %p182, %p183
      %p186 = scmp.ne.s32.totalorder %s169, %s185
      %p187 = scmp.eq.s32.totalorder %s24, 0
      %p188 = por %p186, %p187
      %p189 = scmp.le.s32.totalorder 1, %s18
      %p190 = scmp.lt.s32.totalorder %s18, 3
      %p191 = pnand %p189, %p190
      %p192 = pneg %p191
      // Predicated region
      $region9: #{tpu_custom_call.1} parent=5 // pred_check
        _
      $region10: #{tpu_custom_call.1} parent=5 // pred_check_branch
        %194 = sbr.rel (%p191) target = $region12
      $region11: #{tpu_custom_call.1} parent=5 // pred_region
        %s195 = ssub.s32 %s18, 1
        // Predicated region
        $region13: #{tpu_custom_call.1} parent=11 // pred_check
          %p196 = pneg %p82
        $region14: #{tpu_custom_call.1} parent=11 // pred_check_branch
          %198 = sbr.rel (%p196) target = $region16
        $region15: #{tpu_custom_call.1} parent=11 // pred_region
          %s200 = ssub.s32 256, 256
          %201 = vsyncadd [#allocation7], %s200
          %s202 = smul.addr %s28, 64
          %s203 = scalar_lea.hbm %s1, %s202
          %s204 = sshll.u32 [#allocation6], 4
          %s205 = int_to_ptr.vmem [resolvable:$true] %s204
          %210 = dma.hbm_to_vmem [thread:$0]  %s203, 256, %s205, [#allocation7], 64, 64, 4
        $region16: #{tpu_custom_call.1} parent=11 // pred_fallthru
          _
        // Predicated region
        $region17: #{tpu_custom_call.1} parent=11 // pred_check
          %p211 = pneg %p108
        $region18: #{tpu_custom_call.1} parent=11 // pred_check_branch
          %213 = sbr.rel (%p211) target = $region20
        $region19: #{tpu_custom_call.1} parent=11 // pred_region
          %p214 = scmp.lt.s32.totalorder %s28, 0
          %s215 = scalar_select %p214, %s28, 0
          %s216 = scalar_lea.vmem %s2, %s215
        $region20: #{tpu_custom_call.1} parent=11 // pred_fallthru
          _
        // Predicated region
        $region21: #{tpu_custom_call.1} parent=11 // pred_check
          %p217 = pneg %p134
        $region22: #{tpu_custom_call.1} parent=11 // pred_check_branch
          %219 = sbr.rel (%p217) target = $region24
        $region23: #{tpu_custom_call.1} parent=11 // pred_region
          %s220 = smul.u32 16, %s28
          %s222 = ssub.s32 1024, 1024
          %223 = vsyncadd [#allocation7], %s222
          %s224 = smul.addr %s220, 64
          %s225 = scalar_lea.hbm %s3, %s224
          %s226 = sshll.u32 [#allocation8], 4
          %s227 = int_to_ptr.vmem [resolvable:$true] %s226
          %232 = dma.hbm_to_vmem [thread:$0]  %s225, 1024, %s227, [#allocation7], 64, 64, 4
        $region24: #{tpu_custom_call.1} parent=11 // pred_fallthru
          _
        // Predicated region
        $region25: #{tpu_custom_call.1} parent=11 // pred_check
          %p233 = pneg %p155
        $region26: #{tpu_custom_call.1} parent=11 // pred_check_branch
          %235 = sbr.rel (%p233) target = $region28
        $region27: #{tpu_custom_call.1} parent=11 // pred_region
          _
        $region28: #{tpu_custom_call.1} parent=11 // pred_fallthru
          _
      $region12: #{tpu_custom_call.1} parent=5 // pred_fallthru
        _
      %p236 = scmp.lt.s32.totalorder %s18, 2
      // Predicated region
      $region29: #{tpu_custom_call.1} parent=5 // pred_check
        %p237 = pneg %p236
      $region30: #{tpu_custom_call.1} parent=5 // pred_check_branch
        %239 = sbr.rel (%p237) target = $region32
      $region31: #{tpu_custom_call.1} parent=5 // pred_region
        // Predicated region
        $region33: #{tpu_custom_call.1} parent=31 // pred_check
          %p240 = pneg %p50
        $region34: #{tpu_custom_call.1} parent=31 // pred_check_branch
          %242 = sbr.rel (%p240) target = $region36
        $region35: #{tpu_custom_call.1} parent=31 // pred_region
          %s243 = sand.u32 %s40, 1
          %s244 = scalar_lea.sflag [#allocation4], %s243
          %s245 = sand.u32 %s40, 1
          %s246 = smul.addr %s245, 4
          %s247 = scalar_lea.vmem [#allocation3], %s246
          %s249 = ssub.s32 64, 64
          %250 = vsyncadd %s244, %s249
          %s251 = smul.addr %s25, 64
          %s252 = scalar_lea.hbm %s0, %s251
          %s254 = sshll.u32 %s247, 4
          %s255 = int_to_ptr.vmem [resolvable:$true] %s254
          %257 = dma.hbm_to_vmem [thread:$0]  %s252, 64, %s255, %s244
        $region36: #{tpu_custom_call.1} parent=31 // pred_fallthru
          _
      $region32: #{tpu_custom_call.1} parent=5 // pred_fallthru
        _
      %p258 = scmp.le.s32.totalorder 1, %s18
      %p259 = scmp.lt.s32.totalorder %s18, 3
      %p260 = pnand %p258, %p259
      %p261 = pneg %p260
      // Predicated region
      $region37: #{tpu_custom_call.1} parent=5 // pred_check
        _
      $region38: #{tpu_custom_call.1} parent=5 // pred_check_branch
        %263 = sbr.rel (%p260) target = $region40
      $region39: #{tpu_custom_call.1} parent=5 // pred_region
        %s264 = ssub.s32 %s18, 1
        %s265 = sand.u32 %s43, 1
        %s266 = scalar_lea.sflag [#allocation4], %s265
        %s267 = sand.u32 %s43, 1
        %s268 = smul.addr %s267, 4
        %s269 = scalar_lea.vmem [#allocation3], %s268
        // Predicated region
        $region41: #{tpu_custom_call.1} parent=39 // pred_check
          %p270 = pneg %p56
        $region42: #{tpu_custom_call.1} parent=39 // pred_check_branch
          %272 = sbr.rel (%p270) target = $region44
        $region43: #{tpu_custom_call.1} parent=39 // pred_region
          %273 = dma.done %s266, 64
        $region44: #{tpu_custom_call.1} parent=39 // pred_fallthru
          _
        // Predicated region
        $region45: #{tpu_custom_call.1} parent=39 // pred_check
          %p274 = pneg %p82
        $region46: #{tpu_custom_call.1} parent=39 // pred_check_branch
          %276 = sbr.rel (%p274) target = $region48
        $region47: #{tpu_custom_call.1} parent=39 // pred_region
          %277 = dma.done [#allocation7], 256
        $region48: #{tpu_custom_call.1} parent=39 // pred_fallthru
          _
        // Predicated region
        $region49: #{tpu_custom_call.1} parent=39 // pred_check
          %p278 = pneg %p134
        $region50: #{tpu_custom_call.1} parent=39 // pred_check_branch
          %280 = sbr.rel (%p278) target = $region52
        $region51: #{tpu_custom_call.1} parent=39 // pred_region
          %281 = dma.done [#allocation7], 1024
        $region52: #{tpu_custom_call.1} parent=39 // pred_fallthru
          _
        %s282 = sand.u32 %s43, 1
        %s283 = scalar_lea.sflag [#allocation4], %s282
        %s284 = sand.u32 %s43, 1
        %s285 = smul.addr %s284, 4
        %s286 = scalar_lea.vmem [#allocation3], %s285
        %p287 = pneg %p56
        %p288 = pneg %p53
        %p289 = pneg %p82
        %p290 = pneg %p79
        %p291 = scmp.lt.s32.totalorder %s28, 0
        %s292 = scalar_select %p291, %s28, 0
        %s293 = scalar_lea.vmem %s2, %s292
        %p294 = pneg %p108
        %p295 = pneg %p105
        %p296 = pneg %p134
        %p297 = pneg %p131
        %p298 = pneg %p155
        %p299 = pneg %p152
        %p300 = pneg %p181
        %p301 = pneg %p178
        %s302 = sand.u32 %s168, 1
        %s303 = scalar_lea.sflag [#allocation5], %s302
        %s304 = sand.u32 %s168, 1
        %s305 = smul.addr %s304, 8
        %s306 = scalar_lea.vmem [#allocation9], %s305
        %p307 = scmp.lt.s32.totalorder %s28, 0
        %s308 = scalar_select %p307, %s28, 0
        %s309 = scalar_lea.vmem %s2, %s308
        %s310 = smul.u32 16, %s28
        %p312 = scmp.eq.s32.totalorder %s28, 0
        // Predicated region
        $region53: #{tpu_custom_call.1} parent=39 // pred_check
          %p313 = pneg %p312
        $region54: #{tpu_custom_call.1} parent=39 // pred_check_branch
          %315 = sbr.rel (%p313) target = $region56
        $region55: #{tpu_custom_call.1} parent=39 // pred_region
          %316 = vst [vmem:[#allocation2] sm:$0xff] 0.0
        $region56: #{tpu_custom_call.1} parent=39 // pred_fallthru
          _
        %v317 = vld [vmem:[%s269] sm:$0xf]
        %v318 = vld [vmem:[#allocation6] sm:$0xf]
        %v319 = vld [vmem:[#allocation6 + $0x4] sm:$0xf]
        %v320 = vld [vmem:[#allocation6 + $0x8] sm:$0xf]
        %v321 = vld [vmem:[#allocation6 + $0xc] sm:$0xf]
        %v322 = vld [vmem:[%s309] sm:$0x1]
        %v324 = vlaneseq
        %v325 = vshrl.u32 %v324, 7
        %v326 = vsub.s32 0, %v325
        %v327 = vrot.slane %v322, %v326
        %v333 = vunpack.c.l.b16 %v318
        %v334 = vunpack.c.l.b16 %v319
        %v335 = vunpack.c.l.b16 %v320
        %v336 = vunpack.c.l.b16 %v321
        %v337 = vpack.c.b16 %v334, %v333
        %v338 = vpack.c.b16 %v336, %v335
        %vm341 = vcmask 261120
        %v343 = vsel %vm341, %v317, 0
        %345 = vmatprep.subr.bf16.mxu0 0
        %346 = vmatpush1.bf16.msra.mxu0 %v337
        %347 = vmatprep.subr.bf16.mxu0 0
        %348 = vmatpush1.bf16.msra.mxu0 %v338
        %349 = vmatprep.subr.bf16.mxu0 0
        %350 = vmatpush1.bf16.msra.mxu0 0
        %351 = vmatprep.subr.bf16.mxu0 0
        %352 = vmatpush1.bf16.msra.mxu0 0
        %353 = vmatprep.subr.bf16.mxu0 0
        %354 = vmatpush1.bf16.msra.mxu0 0
        %355 = vmatprep.subr.bf16.mxu0 0
        %356 = vmatpush1.bf16.msra.mxu0 0
        %357 = vmatprep.subr.bf16.mxu0 0
        %358 = vmatpush1.bf16.msra.mxu0 0
        %359 = vmatprep.subr.bf16.mxu0 0
        %360 = vmatpush1.bf16.msra.mxu0 0
        %361 = vmatprep.subr.bf16.mxu0 0
        %362 = vmatpush1.bf16.msra.mxu0 0
        %363 = vmatprep.subr.bf16.mxu0 0
        %364 = vmatpush1.bf16.msra.mxu0 0
        %365 = vmatprep.subr.bf16.mxu0 0
        %366 = vmatpush1.bf16.msra.mxu0 0
        %367 = vmatprep.subr.bf16.mxu0 0
        %368 = vmatpush1.bf16.msra.mxu0 0
        %369 = vmatprep.subr.bf16.mxu0 0
        %370 = vmatpush1.bf16.msra.mxu0 0
        %371 = vmatprep.subr.bf16.mxu0 0
        %372 = vmatpush1.bf16.msra.mxu0 0
        %373 = vmatprep.subr.bf16.mxu0 0
        %374 = vmatpush1.bf16.msra.mxu0 0
        %375 = vmatprep.subr.bf16.mxu0 0
        %376 = vmatpush1.bf16.msra.mxu0 0
        %377 = vmatprep.mubr.bf16.mxu0 0
        %378 = vmatmul.mubr.bf16.gmra.mrb[0].mxu0 %v343
        %v379 = vpop.f32.mrb[0].mxu0
        %v380 = vadd.f32 %v327, %v379
        %v381 = vpop.f32.mrb[0].mxu0
        %v382 = vpop.f32.mrb[0].mxu0
        %v383 = vpop.f32.mrb[0].mxu0
        %384 = vdwg.mxu0
        %v385 = vmax.f32 %v380, 0.0
        %v386 = vld [vmem:[#allocation2] sm:$0xff]
        %v387 = vpack.c.bf16 %v385, %v385
        %v388 = vld [vmem:[#allocation8] sm:$0xf]
        %v389 = vld [vmem:[#allocation8 + $0x4] sm:$0xf]
        %v390 = vld [vmem:[#allocation8 + $0x8] sm:$0xf]
        %v391 = vld [vmem:[#allocation8 + $0xc] sm:$0xf]
        %v392 = vld [vmem:[#allocation8 + $0x10] sm:$0xf]
        %v393 = vld [vmem:[#allocation8 + $0x14] sm:$0xf]
        %v394 = vld [vmem:[#allocation8 + $0x18] sm:$0xf]
        %v395 = vld [vmem:[#allocation8 + $0x1c] sm:$0xf]
        %v396 = vld [vmem:[#allocation8 + $0x20] sm:$0xf]
        %v397 = vld [vmem:[#allocation8 + $0x24] sm:$0xf]
        %v398 = vld [vmem:[#allocation8 + $0x28] sm:$0xf]
        %v399 = vld [vmem:[#allocation8 + $0x2c] sm:$0xf]
        %v400 = vld [vmem:[#allocation8 + $0x30] sm:$0xf]
        %v401 = vld [vmem:[#allocation8 + $0x34] sm:$0xf]
        %v402 = vld [vmem:[#allocation8 + $0x38] sm:$0xf]
        %v403 = vld [vmem:[#allocation8 + $0x3c] sm:$0xf]
        %v420 = vunpack.c.l.b16 %v388
        %v421 = vunpack.c.l.b16 %v389
        %v422 = vunpack.c.l.b16 %v390
        %v423 = vunpack.c.l.b16 %v391
        %v424 = vunpack.c.l.b16 %v392
        %v425 = vunpack.c.l.b16 %v393
        %v426 = vunpack.c.l.b16 %v394
        %v427 = vunpack.c.l.b16 %v395
        %v428 = vunpack.c.l.b16 %v396
        %v429 = vunpack.c.l.b16 %v397
        %v430 = vunpack.c.l.b16 %v398
        %v431 = vunpack.c.l.b16 %v399
        %v432 = vunpack.c.l.b16 %v400
        %v433 = vunpack.c.l.b16 %v401
        %v434 = vunpack.c.l.b16 %v402
        %v435 = vunpack.c.l.b16 %v403
        %v436 = vpack.c.b16 %v421, %v420
        %v437 = vpack.c.b16 %v423, %v422
        %v438 = vpack.c.b16 %v425, %v424
        %v439 = vpack.c.b16 %v427, %v426
        %v440 = vpack.c.b16 %v429, %v428
        %v441 = vpack.c.b16 %v431, %v430
        %v442 = vpack.c.b16 %v433, %v432
        %v443 = vpack.c.b16 %v435, %v434
        %452 = vmatprep.subr.bf16.mxu0 0
        %453 = vmatpush1.bf16.msra.mxu0 %v436
        %454 = vmatprep.subr.bf16.mxu0 0
        %455 = vmatpush1.bf16.msra.mxu0 %v437
        %456 = vmatprep.subr.bf16.mxu0 0
        %457 = vmatpush1.bf16.msra.mxu0 %v438
        %458 = vmatprep.subr.bf16.mxu0 0
        %459 = vmatpush1.bf16.msra.mxu0 %v439
        %460 = vmatprep.subr.bf16.mxu0 0
        %461 = vmatpush1.bf16.msra.mxu0 %v440
        %462 = vmatprep.subr.bf16.mxu0 0
        %463 = vmatpush1.bf16.msra.mxu0 %v441
        %464 = vmatprep.subr.bf16.mxu0 0
        %465 = vmatpush1.bf16.msra.mxu0 %v442
        %466 = vmatprep.subr.bf16.mxu0 0
        %467 = vmatpush1.bf16.msra.mxu0 %v443
        %468 = vmatprep.subr.bf16.mxu0 0
        %469 = vmatpush1.bf16.msra.mxu0 0
        %470 = vmatprep.subr.bf16.mxu0 0
        %471 = vmatpush1.bf16.msra.mxu0 0
        %472 = vmatprep.subr.bf16.mxu0 0
        %473 = vmatpush1.bf16.msra.mxu0 0
        %474 = vmatprep.subr.bf16.mxu0 0
        %475 = vmatpush1.bf16.msra.mxu0 0
        %476 = vmatprep.subr.bf16.mxu0 0
        %477 = vmatpush1.bf16.msra.mxu0 0
        %478 = vmatprep.subr.bf16.mxu0 0
        %479 = vmatpush1.bf16.msra.mxu0 0
        %480 = vmatprep.subr.bf16.mxu0 0
        %481 = vmatpush1.bf16.msra.mxu0 0
        %482 = vmatprep.subr.bf16.mxu0 0
        %483 = vmatpush1.bf16.msra.mxu0 0
        %484 = vmatprep.mubr.bf16.mxu0 0
        %485 = vmatmul.mubr.bf16.gmra.mrb[0].mxu0 %v387
        %v486 = vpop.f32.mrb[0].mxu0
        %v487 = vadd.f32 0.0, %v486
        %v488 = vpop.f32.mrb[0].mxu0
        %v489 = vpop.f32.mrb[0].mxu0
        %v490 = vpop.f32.mrb[0].mxu0
        %491 = vdwg.mxu0
        %v492 = vadd.f32 %v386, %v487
        %493 = vst [vmem:[#allocation2] sm:$0xff] %v492
        // Predicated region
        $region57: #{tpu_custom_call.1} parent=39 // pred_check
          %p494 = pneg %p312
        $region58: #{tpu_custom_call.1} parent=39 // pred_check_branch
          %496 = sbr.rel (%p494) target = $region60
        $region59: #{tpu_custom_call.1} parent=39 // pred_region
          %v497 = vld [vmem:[#allocation2] sm:$0xff]
          %v498 = vld [vmem:[%s4] sm:$0x1]
          %v500 = vlaneseq
          %v501 = vshrl.u32 %v500, 7
          %v502 = vsub.s32 0, %v501
          %v503 = vrot.slane %v498, %v502
          %v505 = vadd.f32 %v497, %v503
          %506 = vst [vmem:[%s306] sm:$0xff] %v505
        $region60: #{tpu_custom_call.1} parent=39 // pred_fallthru
          _
        %s507 = sand.u32 %s168, 1
        %s508 = scalar_lea.sflag [#allocation5], %s507
        %s509 = sand.u32 %s168, 1
        %s510 = smul.addr %s509, 8
        %s511 = scalar_lea.vmem [#allocation9], %s510
        // Predicated region
        $region61: #{tpu_custom_call.1} parent=39 // pred_check
          %p512 = pneg %p178
        $region62: #{tpu_custom_call.1} parent=39 // pred_check_branch
          %514 = sbr.rel (%p512) target = $region64
        $region63: #{tpu_custom_call.1} parent=39 // pred_region
          %s516 = ssub.s32 128, 128
          %517 = vsyncadd %s508, %s516
          %s518 = smul.addr %s27, 128
          %s519 = scalar_lea.hbm %s5, %s518
          %s521 = sshll.u32 %s511, 4
          %s522 = int_to_ptr.vmem [resolvable:$true] %s521
          %524 = dma.vmem_to_hbm [thread:$0]  %s522, 128, %s519, %s508
        $region64: #{tpu_custom_call.1} parent=39 // pred_fallthru
          _
      $region40: #{tpu_custom_call.1} parent=5 // pred_fallthru
        _
      %p525 = scmp.le.s32.totalorder 2, %s18
      // Predicated region
      $region65: #{tpu_custom_call.1} parent=5 // pred_check
        %p526 = pneg %p525
      $region66: #{tpu_custom_call.1} parent=5 // pred_check_branch
        %528 = sbr.rel (%p526) target = $region68
      $region67: #{tpu_custom_call.1} parent=5 // pred_region
        %s529 = ssub.s32 %s18, 2
        // Predicated region
        $region69: #{tpu_custom_call.1} parent=67 // pred_check
          %p530 = pneg %p184
        $region70: #{tpu_custom_call.1} parent=67 // pred_check_branch
          %532 = sbr.rel (%p530) target = $region72
        $region71: #{tpu_custom_call.1} parent=67 // pred_region
          %s533 = sand.u32 %s169, 1
          %s534 = scalar_lea.sflag [#allocation5], %s533
          %s535 = sand.u32 %s169, 1
          %s536 = smul.addr %s535, 8
          %s537 = scalar_lea.vmem [#allocation9], %s536
          %538 = dma.done %s534, 128
        $region72: #{tpu_custom_call.1} parent=67 // pred_fallthru
          _
      $region68: #{tpu_custom_call.1} parent=5 // pred_fallthru
        _
    $region6: #{tpu_custom_call.1} parent=1 // loop_footer
      %s22 = sadd.s32 1, %s18
    $region7: #{tpu_custom_call.1} parent=1 // loop_footer_branch
      %17 = sbr.rel target = $region3
    $region8: #{tpu_custom_call.1} parent=1 // loop_exit
      _
    %539 = vsyncpa [#allocation4], 1
    %s540 = scalar_lea.sflag [#allocation4], 1
    %541 = vsyncpa %s540, 1
    %542 = vsyncpa [#allocation7], 1
    %543 = vsyncpa [#allocation5], 1
    %s544 = scalar_lea.sflag [#allocation5], 1
    %545 = vsyncpa %s544, 1

</llo_original>
